<compile_context>
chip_gen: v7x
topology: tpu7x:2x2x1
jax: 0.10.0
libtpu: 0.0.40
codegen_flags: <defaults>
</compile_context>

<pallas_src>
import functools

import jax
import jax.numpy as jnp
from jax import lax
from jax.experimental import pallas as pl
from jax.experimental.pallas import tpu as pltpu


def _round_up(x: int, m: int) -> int:
    return (x + m - 1) // m * m


def _vtc_kernel(txt_ref, vid_ref, loss_ref, vid_n_ref, col_s_ref, acc_ref, *,
                temperature, matmul_dtype, valid_b, use_mxu_reductions):
    i = pl.program_id(0)
    n_blocks = pl.num_programs(0)
    tm, D = txt_ref.shape
    B_pad = vid_ref.shape[0]
    padded = valid_b < B_pad                       # static Python bool

    inv_t = jnp.float32(1.0 / temperature)
    eps2 = jnp.float32(1e-24)                      # (F.normalize eps = 1e-12) ** 2
    neg = jnp.float32(-1e30)

    # ---- one-time setup: zero the running state, normalize vid ONCE into a
    # resident VMEM scratch (reused by every row block). ----------------------
    @pl.when(i == 0)
    def _init():
        col_s_ref[...] = jnp.zeros_like(col_s_ref)
        acc_ref[...] = jnp.zeros_like(acc_ref)
        vid = vid_ref[...].astype(jnp.float32)
        vid_inv = lax.rsqrt(
            jnp.maximum(jnp.sum(vid * vid, axis=1, keepdims=True), eps2))
        vid_n_ref[...] = (vid * vid_inv).astype(matmul_dtype)

    # ---- per row block: L2-normalize txt rows, fold 1/temperature into them
    # so the (tm, B) logits never need a separate scale pass. ------------------
    txt = txt_ref[...].astype(jnp.float32)
    txt_inv = lax.rsqrt(
        jnp.maximum(jnp.sum(txt * txt, axis=1, keepdims=True), eps2))
    txt_n = txt * (txt_inv * inv_t)                              # (tm, D)

    # logits block (tm, B_pad): contract along D on BOTH operands (no transpose).
    logits = lax.dot_general(
        txt_n.astype(matmul_dtype), vid_n_ref[...],
        dimension_numbers=(((1,), (1,)), ((), ())),
        preferred_element_type=jnp.float32)

    row_start = pl.multiple_of(i * tm, tm)
    if padded:
        col_ids = lax.broadcasted_iota(jnp.int32, (tm, B_pad), 1)
        row_ids = lax.broadcasted_iota(jnp.int32, (tm, 1), 0) + row_start
        row_valid = row_ids < valid_b
        logits = jnp.where((col_ids < valid_b) & row_valid, logits, neg)

    # ---- single exp pass with a STATIC shift: |logits| <= 1/T, so
    # exp(logits - 1/T) in (0, 1] and no online max tracking is needed. -------
    e = jnp.exp(logits - inv_t)                                  # (tm, B_pad) f32

    # Row / column sums of e: use the (otherwise idle) MXU via ones-vector
    # matmuls instead of VPU/XLU reductions.
    if use_mxu_reductions:
        row_sum = lax.dot_general(
            e, jnp.ones((B_pad, 1), jnp.float32),
            dimension_numbers=(((1,), (0,)), ((), ())),
            preferred_element_type=jnp.float32)                  # (tm, 1)
        col_part = lax.dot_general(
            jnp.ones((1, tm), jnp.float32), e,
            dimension_numbers=(((1,), (0,)), ((), ())),
            preferred_element_type=jnp.float32)                  # (1, B_pad)
    else:
        row_sum = jnp.sum(e, axis=1, keepdims=True)
        col_part = jnp.sum(e, axis=0, keepdims=True)
    col_s_ref[...] += col_part

    # Diagonal of the global logits for this row block, straight from the
    # hoisted vid_n scratch (no reload / renormalize of vid).
    vid_blk = vid_n_ref[pl.ds(row_start, tm), :].astype(jnp.float32)
    diag = jnp.sum(txt_n * vid_blk, axis=1, keepdims=True)       # (tm, 1), already /T

    row_lse = jnp.log(row_sum) + inv_t                           # (tm, 1)
    contrib = row_lse - 2.0 * diag
    if padded:
        contrib = jnp.where(row_valid, contrib, 0.0)
    acc_ref[...] += jnp.sum(contrib, keepdims=True)              # Σ row_lse - 2 Σ diag

    @pl.when(i == n_blocks - 1)
    def _finalize():
        col_lse = jnp.log(col_s_ref[...]) + inv_t                # (1, B_pad)
        if padded:
            cids = lax.broadcasted_iota(jnp.int32, (1, B_pad), 1)
            col_lse = jnp.where(cids < valid_b, col_lse, 0.0)
        # loss = (Σ row_lse + Σ col_lse - 2 Σ diag) / (2 B)
        loss_ref[...] = ((acc_ref[...] + jnp.sum(col_lse, keepdims=True))
                         * jnp.float32(0.5 / valid_b))


def vtc_loss(src_txt, src_vid, temperature=0.07, *, block_rows=None,
             matmul_dtype=jnp.float32):
    """Pallas implementation of VTCLoss.forward.

    src_txt: (B, D) float array
    src_vid: (B, D) float array
    returns: scalar float32 loss
    """
    B, D = src_txt.shape
    assert src_vid.shape == (B, D)

    # Physical VMEM budget (fallback is the v7x per-TC size so we never over-ask).
    try:
        vmem_cap = int(pltpu.get_tpu_info().vmem_capacity_bytes)
    except Exception:
        vmem_cap = 64 * 1024 * 1024

    # Row tile: multiple of 8, large enough to amortize per-step overhead,
    # small enough that the (tm, B) f32 logits/exp temporaries stay a modest
    # slice of VMEM.  Ragged batches are padded and masked (no tiny tiles).
    if block_rows is None:
        tm = min(512, _round_up(B, 8))
        while tm > 8 and 6 * tm * _round_up(B, tm) * 4 > vmem_cap // 4:
            tm //= 2
        tm = max(8, _round_up(tm, 8))
    else:
        tm = _round_up(min(block_rows, _round_up(B, 8)), 8)
    B_pad = _round_up(B, tm)
    n_blocks = B_pad // tm

    if B_pad != B:
        pad = B_pad - B
        src_txt = jnp.pad(src_txt, ((0, pad), (0, 0)))
        src_vid = jnp.pad(src_vid, ((0, pad), (0, 0)))

    # VMEM-derived limit (instead of a hard-coded 48 MiB).
    in_isz = jnp.dtype(src_txt.dtype).itemsize
    mm_isz = jnp.dtype(matmul_dtype).itemsize
    est = (2 * tm * D * in_isz                 # txt row blocks (double-buffered)
           + 2 * B_pad * D * in_isz            # resident vid input (worst case 2 bufs)
           + B_pad * D * mm_isz                # hoisted vid_n scratch
           + 4 * tm * B_pad * 4                # logits / exp f32 temporaries (+slack)
           + 6 * tm * D * 4                    # txt f32 temporaries
           + 2 * 8 * _round_up(B_pad, 128) * 4)
    vmem_limit = int(min(max(2 * est, 48 * 1024 * 1024), int(0.9 * vmem_cap)))

    def run(optimized: bool):
        kernel = functools.partial(
            _vtc_kernel, temperature=float(temperature),
            matmul_dtype=matmul_dtype, valid_b=B,
            use_mxu_reductions=optimized)
        vid_kwargs = {}
        if optimized and hasattr(pl, "Buffered"):
            # vid's index_map is constant -> resident; single buffer halves its
            # VMEM footprint (key for v7x's 64 MiB/TC).
            vid_kwargs["pipeline_mode"] = pl.Buffered(1)
        grid_spec = pltpu.PrefetchScalarGridSpec(
            num_scalar_prefetch=0,
            grid=(n_blocks,),
            in_specs=[
                pl.BlockSpec((tm, D), lambda i: (i, 0)),               # txt: streamed
                pl.BlockSpec((B_pad, D), lambda i: (0, 0), **vid_kwargs),  # vid: resident
            ],
            out_specs=pl.BlockSpec((1, 1), lambda i: (0, 0)),
            scratch_shapes=[
                pltpu.VMEM((B_pad, D), matmul_dtype),  # hoisted vid_n (normalized once)
                pltpu.VMEM((1, B_pad), jnp.float32),   # running column sumexp
                pltpu.VMEM((1, 1), jnp.float32),       # running sum(row_lse) - 2*sum(diag)
            ],
        )
        return pl.pallas_call(
            kernel,
            out_shape=jax.ShapeDtypeStruct((1, 1), jnp.float32),
            grid_spec=grid_spec,
            compiler_params=pltpu.CompilerParams(
                # Column state / accumulator carried across row blocks.
                dimension_semantics=("arbitrary",),
                vmem_limit_bytes=vmem_limit),
        )(src_txt, src_vid)

    try:
        out = run(True)
    except Exception:
        # Conservative fallback if pl.Buffered(1) / the ones-matmul reductions
        # fail to lower on this jax/libtpu combination (math is identical).
        out = run(False)
    return out[0, 0]


def _reference(src_txt, src_vid, temperature=0.07):
    # Pure-JAX reference (mirrors the PyTorch module).
    eps = 1e-12
    tn = src_txt / jnp.maximum(jnp.linalg.norm(src_txt, axis=1, keepdims=True), eps)
    vn = src_vid / jnp.maximum(jnp.linalg.norm(src_vid, axis=1, keepdims=True), eps)
    logits = (tn @ vn.T) / temperature
    lse_r = jax.scipy.special.logsumexp(logits, axis=1)
    lse_c = jax.scipy.special.logsumexp(logits, axis=0)
    diag = jnp.diagonal(logits)
    loss_t2v = jnp.mean(lse_r - diag)
    loss_v2t = jnp.mean(lse_c - diag)
    return (loss_t2v + loss_v2t) / 2.0


if __name__ == "__main__":
    key = jax.random.PRNGKey(0)
    k1, k2, k3, k4, k5, k6 = jax.random.split(key, 6)

    # (bs, h_dim) inputs, matching the PyTorch module.
    B, D = 8, 32
    src_txt = jax.random.normal(k1, (B, D), dtype=jnp.float32)
    src_vid = jax.random.normal(k2, (B, D), dtype=jnp.float32)
    loss = jax.block_until_ready(vtc_loss(src_txt, src_vid, temperature=0.07))
    ref = jax.block_until_ready(_reference(src_txt, src_vid, temperature=0.07))
    assert jnp.allclose(loss, ref, atol=1e-4, rtol=1e-4), (loss, ref)

    # Multi-block (tiled) path: hoisted vid_n + online column sumexp across steps.
    txt2 = jax.random.normal(k3, (16, 32), dtype=jnp.float32)
    vid2 = jax.random.normal(k4, (16, 32), dtype=jnp.float32)
    loss2 = jax.block_until_ready(
        vtc_loss(txt2, vid2, temperature=0.07, block_rows=8))
    ref2 = jax.block_until_ready(_reference(txt2, vid2, temperature=0.07))
    assert jnp.allclose(loss2, ref2, atol=1e-4, rtol=1e-4), (loss2, ref2)

    # Ragged batch (B % block_rows != 0): padded rows/columns are masked.
    txt3 = jax.random.normal(k5, (12, 32), dtype=jnp.float32)
    vid3 = jax.random.normal(k6, (12, 32), dtype=jnp.float32)
    loss3 = jax.block_until_ready(
        vtc_loss(txt3, vid3, temperature=0.07, block_rows=8))
    ref3 = jax.block_until_ready(_reference(txt3, vid3, temperature=0.07))
    assert jnp.allclose(loss3, ref3, atol=1e-4, rtol=1e-4), (loss3, ref3)

    print("KERNEL_OK")
</pallas_src>

<mosaic_0001>
module attributes {stable_mosaic.version = 11 : i64} {
  func.func @_vtc_kernel(%arg0: i32, %arg1: memref<8x32xf32, #tpu.memory_space<vmem>>, %arg2: memref<8x32xf32, #tpu.memory_space<vmem>>, %arg3: memref<1x1xf32, #tpu.memory_space<vmem>>, %arg4: memref<8x32xf32, #tpu.memory_space<vmem>>, %arg5: memref<1x8xf32, #tpu.memory_space<vmem>>, %arg6: memref<1x1xf32, #tpu.memory_space<vmem>>) attributes {dimension_semantics = [#tpu.dimension_semantics<arbitrary>], iteration_bounds = array<i64: 1>, scalar_prefetch = 0 : i64, scratch_operands = 3 : i64, tpu.core_type = #tpu.core_type<tc>, window_params = [{transform_indices = @transform_0, window_bounds = array<i64: 8, 32>}, {pipeline_mode = #tpu.pipeline_mode<synchronous>, transform_indices = @transform_1, window_bounds = array<i64: 8, 32>}, {pipeline_mode = #tpu.pipeline_mode<synchronous>, transform_indices = @transform_2, window_bounds = array<i64: 1, 1>}]} {
    %c0_i32 = arith.constant 0 : i32
    %0 = arith.cmpi eq, %arg0, %c0_i32 : i32
    %1 = arith.extui %0 : i1 to i32
    %cst = arith.constant 1.000000e-24 : f32
    %c0_i32_0 = arith.constant 0 : i32
    %2 = arith.cmpi ne, %1, %c0_i32_0 : i32
    scf.if %2 {
      %cst_29 = arith.constant 0.000000e+00 : f32
      %50 = vector.broadcast %cst_29 : f32 to vector<1x8xf32>
      %c0_30 = arith.constant 0 : index
      %c0_31 = arith.constant 0 : index
      %51 = vector.load %arg5[%c0_30, %c0_31] : memref<1x8xf32, #tpu.memory_space<vmem>>, vector<1x8xf32>
      tpu.vector_store %arg5[%c0_30, %c0_31], %50 {strides = array<i32>} : memref<1x8xf32, #tpu.memory_space<vmem>>, vector<1x8xf32>,
      %cst_32 = arith.constant 0.000000e+00 : f32
      %52 = vector.broadcast %cst_32 : f32 to vector<1x1xf32>
      %c0_33 = arith.constant 0 : index
      %c0_34 = arith.constant 0 : index
      %53 = vector.load %arg6[%c0_33, %c0_34] : memref<1x1xf32, #tpu.memory_space<vmem>>, vector<1x1xf32>
      tpu.vector_store %arg6[%c0_33, %c0_34], %52 {strides = array<i32>} : memref<1x1xf32, #tpu.memory_space<vmem>>, vector<1x1xf32>,
      %c0_35 = arith.constant 0 : index
      %c0_36 = arith.constant 0 : index
      %54 = vector.load %arg2[%c0_35, %c0_36] : memref<8x32xf32, #tpu.memory_space<vmem>>, vector<8x32xf32>
      %55 = arith.mulf %54, %54 : vector<8x32xf32>
      %cst_37 = arith.constant dense<0.000000e+00> : vector<8xf32>
      %56 = vector.multi_reduction <add>, %55, %cst_37 [1] : vector<8x32xf32> to vector<8xf32>
      %57 = vector.shape_cast %56 : vector<8xf32> to vector<8x1xf32>
      %58 = vector.broadcast %cst : f32 to vector<8x1xf32>
      %59 = arith.maximumf %57, %58 : vector<8x1xf32>
      %60 = math.rsqrt %59 : vector<8x1xf32>
      %61 = vector.broadcast %60 : vector<8x1xf32> to vector<8x32xf32>
      %62 = arith.mulf %54, %61 : vector<8x32xf32>
      %c0_38 = arith.constant 0 : index
      %c0_39 = arith.constant 0 : index
      %63 = vector.load %arg4[%c0_38, %c0_39] : memref<8x32xf32, #tpu.memory_space<vmem>>, vector<8x32xf32>
      tpu.vector_store %arg4[%c0_38, %c0_39], %62 {strides = array<i32>} : memref<8x32xf32, #tpu.memory_space<vmem>>, vector<8x32xf32>,
    } else {
    }
    %c0 = arith.constant 0 : index
    %c0_1 = arith.constant 0 : index
    %3 = vector.load %arg1[%c0, %c0_1] : memref<8x32xf32, #tpu.memory_space<vmem>>, vector<8x32xf32>
    %4 = arith.mulf %3, %3 : vector<8x32xf32>
    %cst_2 = arith.constant dense<0.000000e+00> : vector<8xf32>
    %5 = vector.multi_reduction <add>, %4, %cst_2 [1] : vector<8x32xf32> to vector<8xf32>
    %6 = vector.shape_cast %5 : vector<8xf32> to vector<8x1xf32>
    %cst_3 = arith.constant 1.000000e-24 : f32
    %7 = vector.broadcast %cst_3 : f32 to vector<8x1xf32>
    %8 = arith.maximumf %6, %7 : vector<8x1xf32>
    %9 = math.rsqrt %8 : vector<8x1xf32>
    %cst_4 = arith.constant 14.2857141 : f32
    %10 = vector.broadcast %cst_4 : f32 to vector<8x1xf32>
    %11 = arith.mulf %9, %10 : vector<8x1xf32>
    %12 = vector.broadcast %11 : vector<8x1xf32> to vector<8x32xf32>
    %13 = arith.mulf %3, %12 : vector<8x32xf32>
    %c0_5 = arith.constant 0 : index
    %c0_6 = arith.constant 0 : index
    %14 = vector.load %arg4[%c0_5, %c0_6] : memref<8x32xf32, #tpu.memory_space<vmem>>, vector<8x32xf32>
    %cst_7 = arith.constant dense<0.000000e+00> : vector<8x8xf32>
    %15 = tpu.matmul %13, %14, %cst_7 {dimension_numbers = #tpu.dot_dimension_numbers<[1], [1], [0], [0], [0, 0, 1, 0], [], []>} : vector<8x32xf32>, vector<8x32xf32>, vector<8x8xf32> -> vector<8x8xf32>
    %c8_i32 = arith.constant 8 : i32
    %16 = arith.muli %arg0, %c8_i32 : i32
    %17 = tpu.assume_multiple %16, 8 : i32
    %cst_8 = arith.constant 14.2857141 : f32
    %18 = vector.broadcast %cst_8 : f32 to vector<8x8xf32>
    %19 = arith.subf %15, %18 : vector<8x8xf32>
    %20 = math.exp %19 : vector<8x8xf32>
    %cst_9 = arith.constant 1.000000e+00 : f32
    %21 = vector.broadcast %cst_9 : f32 to vector<8x1xf32>
    %cst_10 = arith.constant dense<0.000000e+00> : vector<8x1xf32>
    %22 = tpu.matmul %20, %21, %cst_10 {dimension_numbers = #tpu.dot_dimension_numbers<[1], [0], [0], [1], [0, 0, 1, 1], [], []>} : vector<8x8xf32>, vector<8x1xf32>, vector<8x1xf32> -> vector<8x1xf32>
    %cst_11 = arith.constant 1.000000e+00 : f32
    %23 = vector.broadcast %cst_11 : f32 to vector<1x8xf32>
    %cst_12 = arith.constant dense<0.000000e+00> : vector<1x8xf32>
    %24 = tpu.matmul %23, %20, %cst_12 {dimension_numbers = #tpu.dot_dimension_numbers<[1], [0], [0], [1], [0, 0, 1, 1], [], []>} : vector<1x8xf32>, vector<8x8xf32>, vector<1x8xf32> -> vector<1x8xf32>
    %c0_13 = arith.constant 0 : index
    %c0_14 = arith.constant 0 : index
    %25 = vector.load %arg5[%c0_13, %c0_14] : memref<1x8xf32, #tpu.memory_space<vmem>>, vector<1x8xf32>
    %26 = arith.addf %25, %24 : vector<1x8xf32>
    %c0_15 = arith.constant 0 : index
    %c0_16 = arith.constant 0 : index
    %27 = vector.load %arg5[%c0_15, %c0_16] : memref<1x8xf32, #tpu.memory_space<vmem>>, vector<1x8xf32>
    tpu.vector_store %arg5[%c0_15, %c0_16], %26 {strides = array<i32>} : memref<1x8xf32, #tpu.memory_space<vmem>>, vector<1x8xf32>,
    %28 = arith.index_cast %17 : i32 to index
    %c0_17 = arith.constant 0 : index
    %29 = vector.load %arg4[%28, %c0_17] : memref<8x32xf32, #tpu.memory_space<vmem>>, vector<8x32xf32>
    %30 = arith.mulf %13, %29 : vector<8x32xf32>
    %cst_18 = arith.constant dense<0.000000e+00> : vector<8xf32>
    %31 = vector.multi_reduction <add>, %30, %cst_18 [1] : vector<8x32xf32> to vector<8xf32>
    %32 = vector.shape_cast %31 : vector<8xf32> to vector<8x1xf32>
    %33 = math.log %22 : vector<8x1xf32>
    %cst_19 = arith.constant 14.2857141 : f32
    %34 = vector.broadcast %cst_19 : f32 to vector<8x1xf32>
    %35 = arith.addf %33, %34 : vector<8x1xf32>
    %cst_20 = arith.constant 2.000000e+00 : f32
    %36 = vector.broadcast %cst_20 : f32 to vector<8x1xf32>
    %37 = arith.mulf %36, %32 : vector<8x1xf32>
    %38 = arith.subf %35, %37 : vector<8x1xf32>
    %c0_21 = arith.constant 0 : index
    %c0_22 = arith.constant 0 : index
    %39 = vector.load %arg6[%c0_21, %c0_22] : memref<1x1xf32, #tpu.memory_space<vmem>>, vector<1x1xf32>
    %40 = vector.shape_cast %38 : vector<8x1xf32> to vector<1x8x1xf32>
    %cst_23 = arith.constant dense<0.000000e+00> : vector<1xf32>
    %41 = vector.multi_reduction <add>, %40, %cst_23 [1, 2] : vector<1x8x1xf32> to vector<1xf32>
    %42 = vector.shape_cast %41 : vector<1xf32> to vector<1x1x1xf32>
    %43 = vector.extract %42[0, 0, 0] : f32 from vector<1x1x1xf32>
    %44 = vector.broadcast %43 : f32 to vector<1x1xf32>
    %45 = arith.addf %39, %44 : vector<1x1xf32>
    %c0_24 = arith.constant 0 : index
    %c0_25 = arith.constant 0 : index
    %46 = vector.load %arg6[%c0_24, %c0_25] : memref<1x1xf32, #tpu.memory_space<vmem>>, vector<1x1xf32>
    tpu.vector_store %arg6[%c0_24, %c0_25], %45 {strides = array<i32>} : memref<1x1xf32, #tpu.memory_space<vmem>>, vector<1x1xf32>,
    %c0_i32_26 = arith.constant 0 : i32
    %47 = arith.cmpi eq, %arg0, %c0_i32_26 : i32
    %48 = arith.extui %47 : i1 to i32
    %cst_27 = arith.constant 14.2857141 : f32
    %c0_i32_28 = arith.constant 0 : i32
    %49 = arith.cmpi ne, %48, %c0_i32_28 : i32
    scf.if %49 {
      %c0_29 = arith.constant 0 : index
      %c0_30 = arith.constant 0 : index
      %50 = vector.load %arg5[%c0_29, %c0_30] : memref<1x8xf32, #tpu.memory_space<vmem>>, vector<1x8xf32>
      %51 = math.log %50 : vector<1x8xf32>
      %52 = vector.broadcast %cst_27 : f32 to vector<1x8xf32>
      %53 = arith.addf %51, %52 : vector<1x8xf32>
      %c0_31 = arith.constant 0 : index
      %c0_32 = arith.constant 0 : index
      %54 = vector.load %arg6[%c0_31, %c0_32] : memref<1x1xf32, #tpu.memory_space<vmem>>, vector<1x1xf32>
      %55 = vector.shape_cast %53 : vector<1x8xf32> to vector<1x1x8xf32>
      %cst_33 = arith.constant dense<0.000000e+00> : vector<1xf32>
      %56 = vector.multi_reduction <add>, %55, %cst_33 [1, 2] : vector<1x1x8xf32> to vector<1xf32>
      %57 = vector.shape_cast %56 : vector<1xf32> to vector<1x1x1xf32>
      %58 = vector.extract %57[0, 0, 0] : f32 from vector<1x1x1xf32>
      %59 = vector.broadcast %58 : f32 to vector<1x1xf32>
      %60 = arith.addf %54, %59 : vector<1x1xf32>
      %cst_34 = arith.constant 6.250000e-02 : f32
      %61 = vector.broadcast %cst_34 : f32 to vector<1x1xf32>
      %62 = arith.mulf %60, %61 : vector<1x1xf32>
      %c0_35 = arith.constant 0 : index
      %c0_36 = arith.constant 0 : index
      %63 = vector.load %arg3[%c0_35, %c0_36] : memref<1x1xf32, #tpu.memory_space<vmem>>, vector<1x1xf32>
      tpu.vector_store %arg3[%c0_35, %c0_36], %62 {strides = array<i32>} : memref<1x1xf32, #tpu.memory_space<vmem>>, vector<1x1xf32>,
    } else {
    }
    return
  }
  func.func @transform_0(%arg0: i32) -> (i32, i32) {
    %c0_i32 = arith.constant 0 : i32
    %c0_i32_0 = arith.constant 0 : i32
    return %arg0, %c0_i32 : i32, i32
  }
  func.func @transform_1(%arg0: i32) -> (i32, i32) {
    %c0_i32 = arith.constant 0 : i32
    %c0_i32_0 = arith.constant 0 : i32
    %c0_i32_1 = arith.constant 0 : i32
    return %c0_i32, %c0_i32_0 : i32, i32
  }
  func.func @transform_2(%arg0: i32) -> (i32, i32) {
    %c0_i32 = arith.constant 0 : i32
    %c0_i32_0 = arith.constant 0 : i32
    %c0_i32_1 = arith.constant 0 : i32
    return %c0_i32, %c0_i32_0 : i32, i32
  }
}

module attributes {stable_mosaic.version = 11 : i64} {
  func.func @_vtc_kernel(%arg0: i32, %arg1: memref<8x32xf32, #tpu.memory_space<vmem>>, %arg2: memref<8x32xf32, #tpu.memory_space<vmem>>, %arg3: memref<1x1xf32, #tpu.memory_space<vmem>>, %arg4: memref<8x32xf32, #tpu.memory_space<vmem>>, %arg5: memref<1x8xf32, #tpu.memory_space<vmem>>, %arg6: memref<1x1xf32, #tpu.memory_space<vmem>>) attributes {dimension_semantics = [#tpu.dimension_semantics<arbitrary>], iteration_bounds = array<i64: 1>, scalar_prefetch = 0 : i64, scratch_operands = 3 : i64, tpu.core_type = #tpu.core_type<tc>, window_params = [{transform_indices = @transform_0, window_bounds = array<i64: 8, 32>}, {pipeline_mode = #tpu.pipeline_mode<synchronous>, transform_indices = @transform_1, window_bounds = array<i64: 8, 32>}, {pipeline_mode = #tpu.pipeline_mode<synchronous>, transform_indices = @transform_2, window_bounds = array<i64: 1, 1>}]} {
    %c0_i32 = arith.constant 0 : i32
    %0 = arith.cmpi eq, %arg0, %c0_i32 : i32
    %1 = arith.extui %0 : i1 to i32
    %cst = arith.constant 1.000000e-24 : f32
    %c0_i32_0 = arith.constant 0 : i32
    %2 = arith.cmpi ne, %1, %c0_i32_0 : i32
    scf.if %2 {
      %cst_27 = arith.constant 0.000000e+00 : f32
      %50 = vector.broadcast %cst_27 : f32 to vector<1x8xf32>
      %c0_28 = arith.constant 0 : index
      %c0_29 = arith.constant 0 : index
      %51 = vector.load %arg5[%c0_28, %c0_29] : memref<1x8xf32, #tpu.memory_space<vmem>>, vector<1x8xf32>
      tpu.vector_store %arg5[%c0_28, %c0_29], %50 {strides = array<i32>} : memref<1x8xf32, #tpu.memory_space<vmem>>, vector<1x8xf32>,
      %cst_30 = arith.constant 0.000000e+00 : f32
      %52 = vector.broadcast %cst_30 : f32 to vector<1x1xf32>
      %c0_31 = arith.constant 0 : index
      %c0_32 = arith.constant 0 : index
      %53 = vector.load %arg6[%c0_31, %c0_32] : memref<1x1xf32, #tpu.memory_space<vmem>>, vector<1x1xf32>
      tpu.vector_store %arg6[%c0_31, %c0_32], %52 {strides = array<i32>} : memref<1x1xf32, #tpu.memory_space<vmem>>, vector<1x1xf32>,
      %c0_33 = arith.constant 0 : index
      %c0_34 = arith.constant 0 : index
      %54 = vector.load %arg2[%c0_33, %c0_34] : memref<8x32xf32, #tpu.memory_space<vmem>>, vector<8x32xf32>
      %55 = arith.mulf %54, %54 : vector<8x32xf32>
      %cst_35 = arith.constant dense<0.000000e+00> : vector<8xf32>
      %56 = vector.multi_reduction <add>, %55, %cst_35 [1] : vector<8x32xf32> to vector<8xf32>
      %57 = vector.shape_cast %56 : vector<8xf32> to vector<8x1xf32>
      %58 = vector.broadcast %cst : f32 to vector<8x1xf32>
      %59 = arith.maximumf %57, %58 : vector<8x1xf32>
      %60 = math.rsqrt %59 : vector<8x1xf32>
      %61 = vector.broadcast %60 : vector<8x1xf32> to vector<8x32xf32>
      %62 = arith.mulf %54, %61 : vector<8x32xf32>
      %c0_36 = arith.constant 0 : index
      %c0_37 = arith.constant 0 : index
      %63 = vector.load %arg4[%c0_36, %c0_37] : memref<8x32xf32, #tpu.memory_space<vmem>>, vector<8x32xf32>
      tpu.vector_store %arg4[%c0_36, %c0_37], %62 {strides = array<i32>} : memref<8x32xf32, #tpu.memory_space<vmem>>, vector<8x32xf32>,
    } else {
    }
    %c0 = arith.constant 0 : index
    %c0_1 = arith.constant 0 : index
    %3 = vector.load %arg1[%c0, %c0_1] : memref<8x32xf32, #tpu.memory_space<vmem>>, vector<8x32xf32>
    %4 = arith.mulf %3, %3 : vector<8x32xf32>
    %cst_2 = arith.constant dense<0.000000e+00> : vector<8xf32>
    %5 = vector.multi_reduction <add>, %4, %cst_2 [1] : vector<8x32xf32> to vector<8xf32>
    %6 = vector.shape_cast %5 : vector<8xf32> to vector<8x1xf32>
    %cst_3 = arith.constant 1.000000e-24 : f32
    %7 = vector.broadcast %cst_3 : f32 to vector<8x1xf32>
    %8 = arith.maximumf %6, %7 : vector<8x1xf32>
    %9 = math.rsqrt %8 : vector<8x1xf32>
    %cst_4 = arith.constant 14.2857141 : f32
    %10 = vector.broadcast %cst_4 : f32 to vector<8x1xf32>
    %11 = arith.mulf %9, %10 : vector<8x1xf32>
    %12 = vector.broadcast %11 : vector<8x1xf32> to vector<8x32xf32>
    %13 = arith.mulf %3, %12 : vector<8x32xf32>
    %c0_5 = arith.constant 0 : index
    %c0_6 = arith.constant 0 : index
    %14 = vector.load %arg4[%c0_5, %c0_6] : memref<8x32xf32, #tpu.memory_space<vmem>>, vector<8x32xf32>
    %cst_7 = arith.constant dense<0.000000e+00> : vector<8x8xf32>
    %15 = tpu.matmul %13, %14, %cst_7 {dimension_numbers = #tpu.dot_dimension_numbers<[1], [1], [0], [0], [0, 0, 1, 0], [], []>} : vector<8x32xf32>, vector<8x32xf32>, vector<8x8xf32> -> vector<8x8xf32>
    %c8_i32 = arith.constant 8 : i32
    %16 = arith.muli %arg0, %c8_i32 : i32
    %17 = tpu.assume_multiple %16, 8 : i32
    %cst_8 = arith.constant 14.2857141 : f32
    %18 = vector.broadcast %cst_8 : f32 to vector<8x8xf32>
    %19 = arith.subf %15, %18 : vector<8x8xf32>
    %20 = math.exp %19 : vector<8x8xf32>
    %cst_9 = arith.constant dense<0.000000e+00> : vector<8xf32>
    %21 = vector.multi_reduction <add>, %20, %cst_9 [1] : vector<8x8xf32> to vector<8xf32>
    %22 = vector.shape_cast %21 : vector<8xf32> to vector<8x1xf32>
    %cst_10 = arith.constant dense<0.000000e+00> : vector<8xf32>
    %23 = vector.multi_reduction <add>, %20, %cst_10 [0] : vector<8x8xf32> to vector<8xf32>
    %24 = vector.shape_cast %23 : vector<8xf32> to vector<1x8xf32>
    %c0_11 = arith.constant 0 : index
    %c0_12 = arith.constant 0 : index
    %25 = vector.load %arg5[%c0_11, %c0_12] : memref<1x8xf32, #tpu.memory_space<vmem>>, vector<1x8xf32>
    %26 = arith.addf %25, %24 : vector<1x8xf32>
    %c0_13 = arith.constant 0 : index
    %c0_14 = arith.constant 0 : index
    %27 = vector.load %arg5[%c0_13, %c0_14] : memref<1x8xf32, #tpu.memory_space<vmem>>, vector<1x8xf32>
    tpu.vector_store %arg5[%c0_13, %c0_14], %26 {strides = array<i32>} : memref<1x8xf32, #tpu.memory_space<vmem>>, vector<1x8xf32>,
    %28 = arith.index_cast %17 : i32 to index
    %c0_15 = arith.constant 0 : index
    %29 = vector.load %arg4[%28, %c0_15] : memref<8x32xf32, #tpu.memory_space<vmem>>, vector<8x32xf32>
    %30 = arith.mulf %13, %29 : vector<8x32xf32>
    %cst_16 = arith.constant dense<0.000000e+00> : vector<8xf32>
    %31 = vector.multi_reduction <add>, %30, %cst_16 [1] : vector<8x32xf32> to vector<8xf32>
    %32 = vector.shape_cast %31 : vector<8xf32> to vector<8x1xf32>
    %33 = math.log %22 : vector<8x1xf32>
    %cst_17 = arith.constant 14.2857141 : f32
    %34 = vector.broadcast %cst_17 : f32 to vector<8x1xf32>
    %35 = arith.addf %33, %34 : vector<8x1xf32>
    %cst_18 = arith.constant 2.000000e+00 : f32
    %36 = vector.broadcast %cst_18 : f32 to vector<8x1xf32>
    %37 = arith.mulf %36, %32 : vector<8x1xf32>
    %38 = arith.subf %35, %37 : vector<8x1xf32>
    %c0_19 = arith.constant 0 : index
    %c0_20 = arith.constant 0 : index
    %39 = vector.load %arg6[%c0_19, %c0_20] : memref<1x1xf32, #tpu.memory_space<vmem>>, vector<1x1xf32>
    %40 = vector.shape_cast %38 : vector<8x1xf32> to vector<1x8x1xf32>
    %cst_21 = arith.constant dense<0.000000e+00> : vector<1xf32>
    %41 = vector.multi_reduction <add>, %40, %cst_21 [1, 2] : vector<1x8x1xf32> to vector<1xf32>
    %42 = vector.shape_cast %41 : vector<1xf32> to vector<1x1x1xf32>
    %43 = vector.extract %42[0, 0, 0] : f32 from vector<1x1x1xf32>
    %44 = vector.broadcast %43 : f32 to vector<1x1xf32>
    %45 = arith.addf %39, %44 : vector<1x1xf32>
    %c0_22 = arith.constant 0 : index
    %c0_23 = arith.constant 0 : index
    %46 = vector.load %arg6[%c0_22, %c0_23] : memref<1x1xf32, #tpu.memory_space<vmem>>, vector<1x1xf32>
    tpu.vector_store %arg6[%c0_22, %c0_23], %45 {strides = array<i32>} : memref<1x1xf32, #tpu.memory_space<vmem>>, vector<1x1xf32>,
    %c0_i32_24 = arith.constant 0 : i32
    %47 = arith.cmpi eq, %arg0, %c0_i32_24 : i32
    %48 = arith.extui %47 : i1 to i32
    %cst_25 = arith.constant 14.2857141 : f32
    %c0_i32_26 = arith.constant 0 : i32
    %49 = arith.cmpi ne, %48, %c0_i32_26 : i32
    scf.if %49 {
      %c0_27 = arith.constant 0 : index
      %c0_28 = arith.constant 0 : index
      %50 = vector.load %arg5[%c0_27, %c0_28] : memref<1x8xf32, #tpu.memory_space<vmem>>, vector<1x8xf32>
      %51 = math.log %50 : vector<1x8xf32>
      %52 = vector.broadcast %cst_25 : f32 to vector<1x8xf32>
      %53 = arith.addf %51, %52 : vector<1x8xf32>
      %c0_29 = arith.constant 0 : index
      %c0_30 = arith.constant 0 : index
      %54 = vector.load %arg6[%c0_29, %c0_30] : memref<1x1xf32, #tpu.memory_space<vmem>>, vector<1x1xf32>
      %55 = vector.shape_cast %53 : vector<1x8xf32> to vector<1x1x8xf32>
      %cst_31 = arith.constant dense<0.000000e+00> : vector<1xf32>
      %56 = vector.multi_reduction <add>, %55, %cst_31 [1, 2] : vector<1x1x8xf32> to vector<1xf32>
      %57 = vector.shape_cast %56 : vector<1xf32> to vector<1x1x1xf32>
      %58 = vector.extract %57[0, 0, 0] : f32 from vector<1x1x1xf32>
      %59 = vector.broadcast %58 : f32 to vector<1x1xf32>
      %60 = arith.addf %54, %59 : vector<1x1xf32>
      %cst_32 = arith.constant 6.250000e-02 : f32
      %61 = vector.broadcast %cst_32 : f32 to vector<1x1xf32>
      %62 = arith.mulf %60, %61 : vector<1x1xf32>
      %c0_33 = arith.constant 0 : index
      %c0_34 = arith.constant 0 : index
      %63 = vector.load %arg3[%c0_33, %c0_34] : memref<1x1xf32, #tpu.memory_space<vmem>>, vector<1x1xf32>
      tpu.vector_store %arg3[%c0_33, %c0_34], %62 {strides = array<i32>} : memref<1x1xf32, #tpu.memory_space<vmem>>, vector<1x1xf32>,
    } else {
    }
    return
  }
  func.func @transform_0(%arg0: i32) -> (i32, i32) {
    %c0_i32 = arith.constant 0 : i32
    %c0_i32_0 = arith.constant 0 : i32
    return %arg0, %c0_i32 : i32, i32
  }
  func.func @transform_1(%arg0: i32) -> (i32, i32) {
    %c0_i32 = arith.constant 0 : i32
    %c0_i32_0 = arith.constant 0 : i32
    %c0_i32_1 = arith.constant 0 : i32
    return %c0_i32, %c0_i32_0 : i32, i32
  }
  func.func @transform_2(%arg0: i32) -> (i32, i32) {
    %c0_i32 = arith.constant 0 : i32
    %c0_i32_0 = arith.constant 0 : i32
    %c0_i32_1 = arith.constant 0 : i32
    return %c0_i32, %c0_i32_0 : i32, i32
  }
}

</mosaic_0001>

<llo_original>
// kernel: tpu_custom_call.1
$region0: #{tpu_custom_call.1}
  #allocation0 [shape = 'u32[]', space=smem, size = 0x4, offset = 0x4, fixed_abs, tag = 'smem constant byte address 0x4 - core index']
  #allocation1 [shape = 'u32[144,128]{1,0:T(1,128)}', space=vmem, size = 0x12000, scoped, tag = 'internal scratch']
  #allocation2 [shape = 'f32[8,32]{1,0:T(8,128)}', space=vmem, size = 0x1000, scoped, tag = 'scratch operand']
  #allocation3 [shape = 'f32[1,8]{1,0:T(1,128)}', space=vmem, size = 0x200, scoped, tag = 'scratch operand']
  #allocation4 [shape = 'f32[1,1]{1,0:T(1,128)}', space=vmem, size = 0x200, scoped, tag = 'scratch operand']
  %s0 = inlined_call_operand.hbm [shape: f32[8,32], index: 0, kind: input, shape index: {}]
  %s1 = inlined_call_operand.hbm [shape: f32[8,32], index: 1, kind: input, shape index: {}]
  %s2 = inlined_call_operand.hbm [shape: f32[1,1], index: 2, kind: output, shape index: {}]
  %s3 = sld [smem:[#allocation0]]
  $region34: #{tpu_custom_call.1} parent=0
    _
  %s5 = ssub.s32 1, %s3
  %s6 = scalar_select 0, %s5, %s3
  $region1: #{tpu_custom_call.1} parent=0
    #allocation5 [shape = 'u8[4096]{0}', space=vmem, size = 0x1000, scoped, tag = 'input window, operand 0, single buffered']
    #allocation6 [shape = 's32[1]{0}', space=sflag, size = 0x4, scoped, tag = 'scoped memory for tpu_custom_call.1']
    #allocation7 [shape = 's32[1]{0}', space=sflag, size = 0x4, scoped, tag = 'scoped memory for tpu_custom_call.1']
    #allocation8 [shape = 'u8[4096]{0}', space=vmem, size = 0x1000, scoped, tag = 'input window, operand 1, single buffered']
    #allocation9 [shape = 's32[1]{0}', space=sflag, size = 0x4, scoped, tag = 'scoped memory for tpu_custom_call.1']
    #allocation10 [shape = 'u8[512]{0}', space=vmem, size = 0x400, scoped, tag = 'output window, operand 0, single buffered']
    %7 = vsyncpa [#allocation6], 0
    %8 = vsyncpa [#allocation9], 0
    %9 = vsyncpa [#allocation7], 0
    // Predicated region
    $region2: #{tpu_custom_call.1} parent=1 // pred_check
      _
    $region3: #{tpu_custom_call.1} parent=1 // pred_check_branch
      %11 = sbr.rel (0) target = $region5
    $region4: #{tpu_custom_call.1} parent=1 // pred_region
      %s13 = ssub.s32 128, 128
      %14 = vsyncadd [#allocation6], %s13
      %s16 = sshll.u32 [#allocation5], 4
      %s17 = int_to_ptr.vmem [resolvable:$true] %s16
      %19 = dma.hbm_to_vmem [thread:$0]  %s0, 128, %s17, [#allocation6]
    $region5: #{tpu_custom_call.1} parent=1 // pred_fallthru
      _
    // Predicated region
    $region6: #{tpu_custom_call.1} parent=1 // pred_check
      _
    $region7: #{tpu_custom_call.1} parent=1 // pred_check_branch
      %21 = sbr.rel (0) target = $region9
    $region8: #{tpu_custom_call.1} parent=1 // pred_region
      %s23 = ssub.s32 128, 128
      %24 = vsyncadd [#allocation9], %s23
      %s26 = sshll.u32 [#allocation8], 4
      %s27 = int_to_ptr.vmem [resolvable:$true] %s26
      %29 = dma.hbm_to_vmem [thread:$0]  %s1, 128, %s27, [#allocation9]
    $region9: #{tpu_custom_call.1} parent=1 // pred_fallthru
      _
    // Predicated region
    $region10: #{tpu_custom_call.1} parent=1 // pred_check
      _
    $region11: #{tpu_custom_call.1} parent=1 // pred_check_branch
      %31 = sbr.rel (0) target = $region13
    $region12: #{tpu_custom_call.1} parent=1 // pred_region
      %32 = dma.done [#allocation6], 128
    $region13: #{tpu_custom_call.1} parent=1 // pred_fallthru
      _
    // Predicated region
    $region14: #{tpu_custom_call.1} parent=1 // pred_check
      _
    $region15: #{tpu_custom_call.1} parent=1 // pred_check_branch
      %34 = sbr.rel (0) target = $region17
    $region16: #{tpu_custom_call.1} parent=1 // pred_region
      %35 = dma.done [#allocation9], 128
    $region17: #{tpu_custom_call.1} parent=1 // pred_fallthru
      _
    %p36 = scmp.eq.s32.totalorder 0, 0
    // Predicated region
    $region18: #{tpu_custom_call.1} parent=1 // pred_check
      %p37 = pneg %p36
    $region19: #{tpu_custom_call.1} parent=1 // pred_check_branch
      %39 = sbr.rel (%p37) target = $region21
    $region20: #{tpu_custom_call.1} parent=1 // pred_region
      %vm40 = vcmask 57344
      %41 = vst.msk [vmem:[#allocation3] sm:$0x1] %vm40, 0.0
      %vm42 = vcmask 0
      %43 = vst.msk [vmem:[#allocation4] sm:$0x1] %vm42, 0.0
      %v44 = vld [vmem:[#allocation8] sm:$0xff]
      %v45 = vmul.f32 %v44, %v44
      %vm46 = vcmask 261120
      %v47 = vsel %vm46, %v45, 0.0
      %48 = vadd.xlane.f32.xlu0 %v47
      %v49 = vpop.xlane.xlu0 %48
      %v50 = vmax.f32 %v49, 1e-24
      %v51 = vrsqrt.pop %v50
      %v52 = vmul.f32 %v44, %v51
      %53 = vst.msk [vmem:[#allocation2] sm:$0xff] %vm46, %v52
    $region21: #{tpu_custom_call.1} parent=1 // pred_fallthru
      _
    %v54 = vld [vmem:[#allocation5] sm:$0xff]
    %v55 = vmul.f32 %v54, %v54
    %vm56 = vcmask 261120
    %v57 = vsel %vm56, %v55, 0.0
    %58 = vadd.xlane.f32.xlu0 %v57
    %v59 = vpop.xlane.xlu0 %58
    %v60 = vmax.f32 %v59, 1e-24
    %v61 = vrsqrt.pop %v60
    %v62 = vmul.f32 %v61, 14.285714
    %v63 = vmul.f32 %v54, %v62
    %v64 = vld [vmem:[#allocation2] sm:$0xff]
    %v66 = vsel %vm56, %v63, 0
    %v69 = vsel %vm56, %v64, 0
    %71 = vmatprep.subr.mxu0 0.0
    %72 = vmatpush1.xpose.msra.mxu0 %v69
    %73 = vmatprep.subr.mxu0 0.0
    %74 = vmatpush1.xpose.msra.mxu0 0.0
    %75 = vmatprep.subr.mxu0 0.0
    %76 = vmatpush1.xpose.msra.mxu0 0.0
    %77 = vmatprep.subr.mxu0 0.0
    %78 = vmatpush1.xpose.msra.mxu0 0.0
    %79 = vmatprep.subr.mxu0 0.0
    %80 = vmatpush1.xpose.msra.mxu0 0.0
    %81 = vmatprep.subr.mxu0 0.0
    %82 = vmatpush1.xpose.msra.mxu0 0.0
    %83 = vmatprep.subr.mxu0 0.0
    %84 = vmatpush1.xpose.msra.mxu0 0.0
    %85 = vmatprep.subr.mxu0 0.0
    %86 = vmatpush1.xpose.msra.mxu0 0.0
    %87 = vmatprep.subr.mxu0 0.0
    %88 = vmatpush1.xpose.msra.mxu0 0.0
    %89 = vmatprep.subr.mxu0 0.0
    %90 = vmatpush1.xpose.msra.mxu0 0.0
    %91 = vmatprep.subr.mxu0 0.0
    %92 = vmatpush1.xpose.msra.mxu0 0.0
    %93 = vmatprep.subr.mxu0 0.0
    %94 = vmatpush1.xpose.msra.mxu0 0.0
    %95 = vmatprep.subr.mxu0 0.0
    %96 = vmatpush1.xpose.msra.mxu0 0.0
    %97 = vmatprep.subr.mxu0 0.0
    %98 = vmatpush1.xpose.msra.mxu0 0.0
    %99 = vmatprep.subr.mxu0 0.0
    %100 = vmatpush1.xpose.msra.mxu0 0.0
    %101 = vmatprep.subr.mxu0 0.0
    %102 = vmatpush1.xpose.msra.mxu0 0.0
    %103 = vmatprep.subr.mxu0 0.0
    %104 = vmatpush1.xpose.msra.mxu0 0.0
    %105 = vmatprep.subr.mxu0 0.0
    %106 = vmatpush1.xpose.msra.mxu0 0.0
    %107 = vmatprep.subr.mxu0 0.0
    %108 = vmatpush1.xpose.msra.mxu0 0.0
    %109 = vmatprep.subr.mxu0 0.0
    %110 = vmatpush1.xpose.msra.mxu0 0.0
    %111 = vmatprep.subr.mxu0 0.0
    %112 = vmatpush1.xpose.msra.mxu0 0.0
    %113 = vmatprep.subr.mxu0 0.0
    %114 = vmatpush1.xpose.msra.mxu0 0.0
    %115 = vmatprep.subr.mxu0 0.0
    %116 = vmatpush1.xpose.msra.mxu0 0.0
    %117 = vmatprep.subr.mxu0 0.0
    %118 = vmatpush1.xpose.msra.mxu0 0.0
    %119 = vmatprep.subr.mxu0 0.0
    %120 = vmatpush1.xpose.msra.mxu0 0.0
    %121 = vmatprep.subr.mxu0 0.0
    %122 = vmatpush1.xpose.msra.mxu0 0.0
    %123 = vmatprep.subr.mxu0 0.0
    %124 = vmatpush1.xpose.msra.mxu0 0.0
    %125 = vmatprep.subr.mxu0 0.0
    %126 = vmatpush1.xpose.msra.mxu0 0.0
    %127 = vmatprep.subr.mxu0 0.0
    %128 = vmatpush1.xpose.msra.mxu0 0.0
    %129 = vmatprep.subr.mxu0 0.0
    %130 = vmatpush1.xpose.msra.mxu0 0.0
    %131 = vmatprep.subr.mxu0 0.0
    %132 = vmatpush1.xpose.msra.mxu0 0.0
    %133 = vmatprep.subr.mxu0 0.0
    %134 = vmatpush1.xpose.msra.mxu0 0.0
    %135 = vmatprep.mubr.f32.mxu0 0.0
    %136 = vmatmul.mubr.f32.gmra.mrb[0].mxu0 %v66
    %v137 = vpop.f32.mrb[0].mxu0
    %v138 = vadd.f32 0.0, %v137
    %v139 = vpop.f32.mrb[0].mxu0
    %140 = vdwg.mxu0
    %s141 = smul.u32 0, 8
    %v142 = vsub.f32 %v138, 14.285714
    %v143 = vmul.f32 %v142, 1.442695
    %v144 = vpow.pop %v143
    %vm145 = vcmask 64512
    %v147 = vsel %vm145, %v144, 0
    %149 = vmatprep.subr.mxu0 0.0
    %150 = vmatpush1.msra.mxu0 1.0
    %151 = vmatprep.subr.mxu0 0.0
    %152 = vmatpush1.msra.mxu0 0.0
    %153 = vmatprep.subr.mxu0 0.0
    %154 = vmatpush1.msra.mxu0 0.0
    %155 = vmatprep.subr.mxu0 0.0
    %156 = vmatpush1.msra.mxu0 0.0
    %157 = vmatprep.subr.mxu0 0.0
    %158 = vmatpush1.msra.mxu0 0.0
    %159 = vmatprep.subr.mxu0 0.0
    %160 = vmatpush1.msra.mxu0 0.0
    %161 = vmatprep.subr.mxu0 0.0
    %162 = vmatpush1.msra.mxu0 0.0
    %163 = vmatprep.subr.mxu0 0.0
    %164 = vmatpush1.msra.mxu0 0.0
    %165 = vmatprep.subr.mxu0 0.0
    %166 = vmatpush1.msra.mxu0 0.0
    %167 = vmatprep.subr.mxu0 0.0
    %168 = vmatpush1.msra.mxu0 0.0
    %169 = vmatprep.subr.mxu0 0.0
    %170 = vmatpush1.msra.mxu0 0.0
    %171 = vmatprep.subr.mxu0 0.0
    %172 = vmatpush1.msra.mxu0 0.0
    %173 = vmatprep.subr.mxu0 0.0
    %174 = vmatpush1.msra.mxu0 0.0
    %175 = vmatprep.subr.mxu0 0.0
    %176 = vmatpush1.msra.mxu0 0.0
    %177 = vmatprep.subr.mxu0 0.0
    %178 = vmatpush1.msra.mxu0 0.0
    %179 = vmatprep.subr.mxu0 0.0
    %180 = vmatpush1.msra.mxu0 0.0
    %181 = vmatprep.subr.mxu0 0.0
    %182 = vmatpush1.msra.mxu0 0.0
    %183 = vmatprep.subr.mxu0 0.0
    %184 = vmatpush1.msra.mxu0 0.0
    %185 = vmatprep.subr.mxu0 0.0
    %186 = vmatpush1.msra.mxu0 0.0
    %187 = vmatprep.subr.mxu0 0.0
    %188 = vmatpush1.msra.mxu0 0.0
    %189 = vmatprep.subr.mxu0 0.0
    %190 = vmatpush1.msra.mxu0 0.0
    %191 = vmatprep.subr.mxu0 0.0
    %192 = vmatpush1.msra.mxu0 0.0
    %193 = vmatprep.subr.mxu0 0.0
    %194 = vmatpush1.msra.mxu0 0.0
    %195 = vmatprep.subr.mxu0 0.0
    %196 = vmatpush1.msra.mxu0 0.0
    %197 = vmatprep.subr.mxu0 0.0
    %198 = vmatpush1.msra.mxu0 0.0
    %199 = vmatprep.subr.mxu0 0.0
    %200 = vmatpush1.msra.mxu0 0.0
    %201 = vmatprep.subr.mxu0 0.0
    %202 = vmatpush1.msra.mxu0 0.0
    %203 = vmatprep.subr.mxu0 0.0
    %204 = vmatpush1.msra.mxu0 0.0
    %205 = vmatprep.subr.mxu0 0.0
    %206 = vmatpush1.msra.mxu0 0.0
    %207 = vmatprep.subr.mxu0 0.0
    %208 = vmatpush1.msra.mxu0 0.0
    %209 = vmatprep.subr.mxu0 0.0
    %210 = vmatpush1.msra.mxu0 0.0
    %211 = vmatprep.subr.mxu0 0.0
    %212 = vmatpush1.msra.mxu0 0.0
    %213 = vmatprep.mubr.f32.mxu0 0.0
    %214 = vmatmul.mubr.f32.gmra.mrb[0].mxu0 %v147
    %v215 = vpop.f32.mrb[0].mxu0
    %v216 = vadd.f32 0.0, %v215
    %v217 = vpop.f32.mrb[0].mxu0
    %218 = vdwg.mxu0
    %v220 = vsel %vm145, 1.0, 0
    %222 = vmatprep.subr.mxu0 0.0
    %223 = vmatpush1.msra.mxu0 %v144
    %224 = vmatprep.subr.mxu0 0.0
    %225 = vmatpush1.msra.mxu0 0.0
    %226 = vmatprep.subr.mxu0 0.0
    %227 = vmatpush1.msra.mxu0 0.0
    %228 = vmatprep.subr.mxu0 0.0
    %229 = vmatpush1.msra.mxu0 0.0
    %230 = vmatprep.subr.mxu0 0.0
    %231 = vmatpush1.msra.mxu0 0.0
    %232 = vmatprep.subr.mxu0 0.0
    %233 = vmatpush1.msra.mxu0 0.0
    %234 = vmatprep.subr.mxu0 0.0
    %235 = vmatpush1.msra.mxu0 0.0
    %236 = vmatprep.subr.mxu0 0.0
    %237 = vmatpush1.msra.mxu0 0.0
    %238 = vmatprep.subr.mxu0 0.0
    %239 = vmatpush1.msra.mxu0 0.0
    %240 = vmatprep.subr.mxu0 0.0
    %241 = vmatpush1.msra.mxu0 0.0
    %242 = vmatprep.subr.mxu0 0.0
    %243 = vmatpush1.msra.mxu0 0.0
    %244 = vmatprep.subr.mxu0 0.0
    %245 = vmatpush1.msra.mxu0 0.0
    %246 = vmatprep.subr.mxu0 0.0
    %247 = vmatpush1.msra.mxu0 0.0
    %248 = vmatprep.subr.mxu0 0.0
    %249 = vmatpush1.msra.mxu0 0.0
    %250 = vmatprep.subr.mxu0 0.0
    %251 = vmatpush1.msra.mxu0 0.0
    %252 = vmatprep.subr.mxu0 0.0
    %253 = vmatpush1.msra.mxu0 0.0
    %254 = vmatprep.subr.mxu0 0.0
    %255 = vmatpush1.msra.mxu0 0.0
    %256 = vmatprep.subr.mxu0 0.0
    %257 = vmatpush1.msra.mxu0 0.0
    %258 = vmatprep.subr.mxu0 0.0
    %259 = vmatpush1.msra.mxu0 0.0
    %260 = vmatprep.subr.mxu0 0.0
    %261 = vmatpush1.msra.mxu0 0.0
    %262 = vmatprep.subr.mxu0 0.0
    %263 = vmatpush1.msra.mxu0 0.0
    %264 = vmatprep.subr.mxu0 0.0
    %265 = vmatpush1.msra.mxu0 0.0
    %266 = vmatprep.subr.mxu0 0.0
    %267 = vmatpush1.msra.mxu0 0.0
    %268 = vmatprep.subr.mxu0 0.0
    %269 = vmatpush1.msra.mxu0 0.0
    %270 = vmatprep.subr.mxu0 0.0
    %271 = vmatpush1.msra.mxu0 0.0
    %272 = vmatprep.subr.mxu0 0.0
    %273 = vmatpush1.msra.mxu0 0.0
    %274 = vmatprep.subr.mxu0 0.0
    %275 = vmatpush1.msra.mxu0 0.0
    %276 = vmatprep.subr.mxu0 0.0
    %277 = vmatpush1.msra.mxu0 0.0
    %278 = vmatprep.subr.mxu0 0.0
    %279 = vmatpush1.msra.mxu0 0.0
    %280 = vmatprep.subr.mxu0 0.0
    %281 = vmatpush1.msra.mxu0 0.0
    %282 = vmatprep.subr.mxu0 0.0
    %283 = vmatpush1.msra.mxu0 0.0
    %284 = vmatprep.subr.mxu0 0.0
    %285 = vmatpush1.msra.mxu0 0.0
    %286 = vmatprep.mubr.f32.mxu0 0.0
    %287 = vmatmul.mubr.f32.gmra.mrb[0].mxu0 %v220
    %v288 = vpop.f32.mrb[0].mxu0
    %v289 = vadd.f32 0.0, %v288
    %v290 = vpop.f32.mrb[0].mxu0
    %291 = vdwg.mxu0
    %v292 = vld [vmem:[#allocation3] sm:$0x1]
    %v293 = vadd.f32 %v292, %v289
    %vm294 = vcmask 57344
    %295 = vst.msk [vmem:[#allocation3] sm:$0x1] %vm294, %v293
    %s296 = scalar_lea.vmem [#allocation2], %s141
    %v297 = vld [vmem:[%s296] sm:$0xff]
    %v298 = vmul.f32 %v63, %v297
    %v299 = vsel %vm56, %v298, 0.0
    %300 = vadd.xlane.f32.xlu0 %v299
    %v301 = vpop.xlane.xlu0 %300
    %v302 = vlog2.pop %v216
    %v303 = vmul.f32 %v302, 0.6931472
    %v304 = vadd.f32 %v303, 14.285714
    %v305 = vmul.f32 %v301, 2.0
    %v306 = vsub.f32 %v304, %v305
    %v307 = vld [vmem:[#allocation4] sm:$0x1]
    %vm308 = vcmask 7168
    %v309 = vsel %vm308, %v306, 0.0
    %310 = vadd.xlane.f32.xlu0 %v309
    %v311 = vpop.xlane.xlu0 %310
    %v312 = vrot.slane %v311, 4
    %v313 = vadd.f32 %v311, %v312
    %v314 = vrot.slane %v313, 2
    %v315 = vadd.f32 %v313, %v314
    %v316 = vrot.slane %v315, 1
    %v317 = vadd.f32 %v315, %v316
    %s318 = vtos %v317
    %v319 = vstv %s318
    %v320 = vadd.f32 %v307, %v319
    %vm321 = vcmask 0
    %322 = vst.msk [vmem:[#allocation4] sm:$0x1] %vm321, %v320
    // Predicated region
    $region22: #{tpu_custom_call.1} parent=1 // pred_check
      %p323 = pneg %p36
    $region23: #{tpu_custom_call.1} parent=1 // pred_check_branch
      %325 = sbr.rel (%p323) target = $region25
    $region24: #{tpu_custom_call.1} parent=1 // pred_region
      %v326 = vld [vmem:[#allocation3] sm:$0x1]
      %v327 = vlog2.pop %v326
      %v328 = vmul.f32 %v327, 0.6931472
      %v329 = vadd.f32 %v328, 14.285714
      %v330 = vld [vmem:[#allocation4] sm:$0x1]
      %v331 = vsel %vm294, %v329, 0.0
      %332 = vadd.xlane.f32.xlu0 %v331
      %v333 = vpop.xlane.xlu0 %332
      %v334 = vrot.slane %v333, 4
      %v335 = vadd.f32 %v333, %v334
      %v336 = vrot.slane %v335, 2
      %v337 = vadd.f32 %v335, %v336
      %v338 = vrot.slane %v337, 1
      %v339 = vadd.f32 %v337, %v338
      %s340 = vtos %v339
      %v341 = vstv %s340
      %v342 = vadd.f32 %v330, %v341
      %v343 = vmul.f32 %v342, 0.0625
      %344 = vst.msk [vmem:[#allocation10] sm:$0x1] %vm321, %v343
    $region25: #{tpu_custom_call.1} parent=1 // pred_fallthru
      _
    // Predicated region
    $region26: #{tpu_custom_call.1} parent=1 // pred_check
      _
    $region27: #{tpu_custom_call.1} parent=1 // pred_check_branch
      %346 = sbr.rel (0) target = $region29
    $region28: #{tpu_custom_call.1} parent=1 // pred_region
      %s348 = ssub.s32 16, 16
      %349 = vsyncadd [#allocation7], %s348
      %s351 = sshll.u32 [#allocation10], 4
      %s352 = int_to_ptr.vmem [resolvable:$true] %s351
      %354 = dma.vmem_to_hbm [thread:$0]  %s352, 16, %s2, [#allocation7]
    $region29: #{tpu_custom_call.1} parent=1 // pred_fallthru
      _
    // Predicated region
    $region30: #{tpu_custom_call.1} parent=1 // pred_check
      _
    $region31: #{tpu_custom_call.1} parent=1 // pred_check_branch
      %356 = sbr.rel (0) target = $region33
    $region32: #{tpu_custom_call.1} parent=1 // pred_region
      %357 = dma.done [#allocation7], 16
    $region33: #{tpu_custom_call.1} parent=1 // pred_fallthru
      _
    %358 = vsyncpa [#allocation6], 1
    %359 = vsyncpa [#allocation9], 1
    %360 = vsyncpa [#allocation7], 1

// kernel: tpu_custom_call.1
$region0: #{tpu_custom_call.1}
  #allocation0 [shape = 'u32[]', space=smem, size = 0x4, offset = 0x4, fixed_abs, tag = 'smem constant byte address 0x4 - core index']
  #allocation1 [shape = 'u32[144,128]{1,0:T(1,128)}', space=vmem, size = 0x12000, scoped, tag = 'internal scratch']
  #allocation2 [shape = 'f32[8,32]{1,0:T(8,128)}', space=vmem, size = 0x1000, scoped, tag = 'scratch operand']
  #allocation3 [shape = 'f32[1,8]{1,0:T(1,128)}', space=vmem, size = 0x200, scoped, tag = 'scratch operand']
  #allocation4 [shape = 'f32[1,1]{1,0:T(1,128)}', space=vmem, size = 0x200, scoped, tag = 'scratch operand']
  %s0 = inlined_call_operand.hbm [shape: f32[8,32], index: 0, kind: input, shape index: {}]
  %s1 = inlined_call_operand.hbm [shape: f32[8,32], index: 1, kind: input, shape index: {}]
  %s2 = inlined_call_operand.hbm [shape: f32[1,1], index: 2, kind: output, shape index: {}]
  %s3 = sld [smem:[#allocation0]]
  $region34: #{tpu_custom_call.1} parent=0
    _
  %s5 = ssub.s32 1, %s3
  %s6 = scalar_select 0, %s5, %s3
  $region1: #{tpu_custom_call.1} parent=0
    #allocation5 [shape = 'u8[4096]{0}', space=vmem, size = 0x1000, scoped, tag = 'input window, operand 0, single buffered']
    #allocation6 [shape = 's32[1]{0}', space=sflag, size = 0x4, scoped, tag = 'scoped memory for tpu_custom_call.1']
    #allocation7 [shape = 's32[1]{0}', space=sflag, size = 0x4, scoped, tag = 'scoped memory for tpu_custom_call.1']
    #allocation8 [shape = 'u8[4096]{0}', space=vmem, size = 0x1000, scoped, tag = 'input window, operand 1, single buffered']
    #allocation9 [shape = 's32[1]{0}', space=sflag, size = 0x4, scoped, tag = 'scoped memory for tpu_custom_call.1']
    #allocation10 [shape = 'u8[512]{0}', space=vmem, size = 0x400, scoped, tag = 'output window, operand 0, single buffered']
    %7 = vsyncpa [#allocation6], 0
    %8 = vsyncpa [#allocation9], 0
    %9 = vsyncpa [#allocation7], 0
    // Predicated region
    $region2: #{tpu_custom_call.1} parent=1 // pred_check
      _
    $region3: #{tpu_custom_call.1} parent=1 // pred_check_branch
      %11 = sbr.rel (0) target = $region5
    $region4: #{tpu_custom_call.1} parent=1 // pred_region
      %s13 = ssub.s32 128, 128
      %14 = vsyncadd [#allocation6], %s13
      %s16 = sshll.u32 [#allocation5], 4
      %s17 = int_to_ptr.vmem [resolvable:$true] %s16
      %19 = dma.hbm_to_vmem [thread:$0]  %s0, 128, %s17, [#allocation6]
    $region5: #{tpu_custom_call.1} parent=1 // pred_fallthru
      _
    // Predicated region
    $region6: #{tpu_custom_call.1} parent=1 // pred_check
      _
    $region7: #{tpu_custom_call.1} parent=1 // pred_check_branch
      %21 = sbr.rel (0) target = $region9
    $region8: #{tpu_custom_call.1} parent=1 // pred_region
      %s23 = ssub.s32 128, 128
      %24 = vsyncadd [#allocation9], %s23
      %s26 = sshll.u32 [#allocation8], 4
      %s27 = int_to_ptr.vmem [resolvable:$true] %s26
      %29 = dma.hbm_to_vmem [thread:$0]  %s1, 128, %s27, [#allocation9]
    $region9: #{tpu_custom_call.1} parent=1 // pred_fallthru
      _
    // Predicated region
    $region10: #{tpu_custom_call.1} parent=1 // pred_check
      _
    $region11: #{tpu_custom_call.1} parent=1 // pred_check_branch
      %31 = sbr.rel (0) target = $region13
    $region12: #{tpu_custom_call.1} parent=1 // pred_region
      %32 = dma.done [#allocation6], 128
    $region13: #{tpu_custom_call.1} parent=1 // pred_fallthru
      _
    // Predicated region
    $region14: #{tpu_custom_call.1} parent=1 // pred_check
      _
    $region15: #{tpu_custom_call.1} parent=1 // pred_check_branch
      %34 = sbr.rel (0) target = $region17
    $region16: #{tpu_custom_call.1} parent=1 // pred_region
      %35 = dma.done [#allocation9], 128
    $region17: #{tpu_custom_call.1} parent=1 // pred_fallthru
      _
    %p36 = scmp.eq.s32.totalorder 0, 0
    // Predicated region
    $region18: #{tpu_custom_call.1} parent=1 // pred_check
      %p37 = pneg %p36
    $region19: #{tpu_custom_call.1} parent=1 // pred_check_branch
      %39 = sbr.rel (%p37) target = $region21
    $region20: #{tpu_custom_call.1} parent=1 // pred_region
      %vm40 = vcmask 57344
      %41 = vst.msk [vmem:[#allocation3] sm:$0x1] %vm40, 0.0
      %vm42 = vcmask 0
      %43 = vst.msk [vmem:[#allocation4] sm:$0x1] %vm42, 0.0
      %v44 = vld [vmem:[#allocation8] sm:$0xff]
      %v45 = vmul.f32 %v44, %v44
      %vm46 = vcmask 261120
      %v47 = vsel %vm46, %v45, 0.0
      %48 = vadd.xlane.f32.xlu0 %v47
      %v49 = vpop.xlane.xlu0 %48
      %v50 = vmax.f32 %v49, 1e-24
      %v51 = vrsqrt.pop %v50
      %v52 = vmul.f32 %v44, %v51
      %53 = vst.msk [vmem:[#allocation2] sm:$0xff] %vm46, %v52
    $region21: #{tpu_custom_call.1} parent=1 // pred_fallthru
      _
    %v54 = vld [vmem:[#allocation5] sm:$0xff]
    %v55 = vmul.f32 %v54, %v54
    %vm56 = vcmask 261120
    %v57 = vsel %vm56, %v55, 0.0
    %58 = vadd.xlane.f32.xlu0 %v57
    %v59 = vpop.xlane.xlu0 %58
    %v60 = vmax.f32 %v59, 1e-24
    %v61 = vrsqrt.pop %v60
    %v62 = vmul.f32 %v61, 14.285714
    %v63 = vmul.f32 %v54, %v62
    %v64 = vld [vmem:[#allocation2] sm:$0xff]
    %v66 = vsel %vm56, %v63, 0
    %v69 = vsel %vm56, %v64, 0
    %71 = vmatprep.subr.mxu0 0.0
    %72 = vmatpush1.xpose.msra.mxu0 %v69
    %73 = vmatprep.subr.mxu0 0.0
    %74 = vmatpush1.xpose.msra.mxu0 0.0
    %75 = vmatprep.subr.mxu0 0.0
    %76 = vmatpush1.xpose.msra.mxu0 0.0
    %77 = vmatprep.subr.mxu0 0.0
    %78 = vmatpush1.xpose.msra.mxu0 0.0
    %79 = vmatprep.subr.mxu0 0.0
    %80 = vmatpush1.xpose.msra.mxu0 0.0
    %81 = vmatprep.subr.mxu0 0.0
    %82 = vmatpush1.xpose.msra.mxu0 0.0
    %83 = vmatprep.subr.mxu0 0.0
    %84 = vmatpush1.xpose.msra.mxu0 0.0
    %85 = vmatprep.subr.mxu0 0.0
    %86 = vmatpush1.xpose.msra.mxu0 0.0
    %87 = vmatprep.subr.mxu0 0.0
    %88 = vmatpush1.xpose.msra.mxu0 0.0
    %89 = vmatprep.subr.mxu0 0.0
    %90 = vmatpush1.xpose.msra.mxu0 0.0
    %91 = vmatprep.subr.mxu0 0.0
    %92 = vmatpush1.xpose.msra.mxu0 0.0
    %93 = vmatprep.subr.mxu0 0.0
    %94 = vmatpush1.xpose.msra.mxu0 0.0
    %95 = vmatprep.subr.mxu0 0.0
    %96 = vmatpush1.xpose.msra.mxu0 0.0
    %97 = vmatprep.subr.mxu0 0.0
    %98 = vmatpush1.xpose.msra.mxu0 0.0
    %99 = vmatprep.subr.mxu0 0.0
    %100 = vmatpush1.xpose.msra.mxu0 0.0
    %101 = vmatprep.subr.mxu0 0.0
    %102 = vmatpush1.xpose.msra.mxu0 0.0
    %103 = vmatprep.subr.mxu0 0.0
    %104 = vmatpush1.xpose.msra.mxu0 0.0
    %105 = vmatprep.subr.mxu0 0.0
    %106 = vmatpush1.xpose.msra.mxu0 0.0
    %107 = vmatprep.subr.mxu0 0.0
    %108 = vmatpush1.xpose.msra.mxu0 0.0
    %109 = vmatprep.subr.mxu0 0.0
    %110 = vmatpush1.xpose.msra.mxu0 0.0
    %111 = vmatprep.subr.mxu0 0.0
    %112 = vmatpush1.xpose.msra.mxu0 0.0
    %113 = vmatprep.subr.mxu0 0.0
    %114 = vmatpush1.xpose.msra.mxu0 0.0
    %115 = vmatprep.subr.mxu0 0.0
    %116 = vmatpush1.xpose.msra.mxu0 0.0
    %117 = vmatprep.subr.mxu0 0.0
    %118 = vmatpush1.xpose.msra.mxu0 0.0
    %119 = vmatprep.subr.mxu0 0.0
    %120 = vmatpush1.xpose.msra.mxu0 0.0
    %121 = vmatprep.subr.mxu0 0.0
    %122 = vmatpush1.xpose.msra.mxu0 0.0
    %123 = vmatprep.subr.mxu0 0.0
    %124 = vmatpush1.xpose.msra.mxu0 0.0
    %125 = vmatprep.subr.mxu0 0.0
    %126 = vmatpush1.xpose.msra.mxu0 0.0
    %127 = vmatprep.subr.mxu0 0.0
    %128 = vmatpush1.xpose.msra.mxu0 0.0
    %129 = vmatprep.subr.mxu0 0.0
    %130 = vmatpush1.xpose.msra.mxu0 0.0
    %131 = vmatprep.subr.mxu0 0.0
    %132 = vmatpush1.xpose.msra.mxu0 0.0
    %133 = vmatprep.subr.mxu0 0.0
    %134 = vmatpush1.xpose.msra.mxu0 0.0
    %135 = vmatprep.mubr.f32.mxu0 0.0
    %136 = vmatmul.mubr.f32.gmra.mrb[0].mxu0 %v66
    %v137 = vpop.f32.mrb[0].mxu0
    %v138 = vadd.f32 0.0, %v137
    %v139 = vpop.f32.mrb[0].mxu0
    %140 = vdwg.mxu0
    %s141 = smul.u32 0, 8
    %v142 = vsub.f32 %v138, 14.285714
    %v143 = vmul.f32 %v142, 1.442695
    %v144 = vpow.pop %v143
    %vm145 = vcmask 64512
    %v146 = vsel %vm145, %v144, 0.0
    %147 = vadd.xlane.f32.xlu0 %v146
    %v148 = vpop.xlane.xlu0 %147
    %v149 = vrot.slane %v146, 4
    %v150 = vadd.f32 %v146, %v149
    %v151 = vrot.slane %v150, 2
    %v152 = vadd.f32 %v150, %v151
    %v153 = vrot.slane %v152, 1
    %v154 = vadd.f32 %v152, %v153
    %v155 = vld [vmem:[#allocation3] sm:$0x1]
    %v156 = vadd.f32 %v155, %v154
    %vm157 = vcmask 57344
    %158 = vst.msk [vmem:[#allocation3] sm:$0x1] %vm157, %v156
    %s159 = scalar_lea.vmem [#allocation2], %s141
    %v160 = vld [vmem:[%s159] sm:$0xff]
    %v161 = vmul.f32 %v63, %v160
    %v162 = vsel %vm56, %v161, 0.0
    %163 = vadd.xlane.f32.xlu0 %v162
    %v164 = vpop.xlane.xlu0 %163
    %v165 = vlog2.pop %v148
    %v166 = vmul.f32 %v165, 0.6931472
    %v167 = vadd.f32 %v166, 14.285714
    %v168 = vmul.f32 %v164, 2.0
    %v169 = vsub.f32 %v167, %v168
    %v170 = vld [vmem:[#allocation4] sm:$0x1]
    %vm171 = vcmask 7168
    %v172 = vsel %vm171, %v169, 0.0
    %173 = vadd.xlane.f32.xlu0 %v172
    %v174 = vpop.xlane.xlu0 %173
    %v175 = vrot.slane %v174, 4
    %v176 = vadd.f32 %v174, %v175
    %v177 = vrot.slane %v176, 2
    %v178 = vadd.f32 %v176, %v177
    %v179 = vrot.slane %v178, 1
    %v180 = vadd.f32 %v178, %v179
    %s181 = vtos %v180
    %v182 = vstv %s181
    %v183 = vadd.f32 %v170, %v182
    %vm184 = vcmask 0
    %185 = vst.msk [vmem:[#allocation4] sm:$0x1] %vm184, %v183
    // Predicated region
    $region22: #{tpu_custom_call.1} parent=1 // pred_check
      %p186 = pneg %p36
    $region23: #{tpu_custom_call.1} parent=1 // pred_check_branch
      %188 = sbr.rel (%p186) target = $region25
    $region24: #{tpu_custom_call.1} parent=1 // pred_region
      %v189 = vld [vmem:[#allocation3] sm:$0x1]
      %v190 = vlog2.pop %v189
      %v191 = vmul.f32 %v190, 0.6931472
      %v192 = vadd.f32 %v191, 14.285714
      %v193 = vld [vmem:[#allocation4] sm:$0x1]
      %v194 = vsel %vm157, %v192, 0.0
      %195 = vadd.xlane.f32.xlu0 %v194
      %v196 = vpop.xlane.xlu0 %195
      %v197 = vrot.slane %v196, 4
      %v198 = vadd.f32 %v196, %v197
      %v199 = vrot.slane %v198, 2
      %v200 = vadd.f32 %v198, %v199
      %v201 = vrot.slane %v200, 1
      %v202 = vadd.f32 %v200, %v201
      %s203 = vtos %v202
      %v204 = vstv %s203
      %v205 = vadd.f32 %v193, %v204
      %v206 = vmul.f32 %v205, 0.0625
      %207 = vst.msk [vmem:[#allocation10] sm:$0x1] %vm184, %v206
    $region25: #{tpu_custom_call.1} parent=1 // pred_fallthru
      _
    // Predicated region
    $region26: #{tpu_custom_call.1} parent=1 // pred_check
      _
    $region27: #{tpu_custom_call.1} parent=1 // pred_check_branch
      %209 = sbr.rel (0) target = $region29
    $region28: #{tpu_custom_call.1} parent=1 // pred_region
      %s211 = ssub.s32 16, 16
      %212 = vsyncadd [#allocation7], %s211
      %s214 = sshll.u32 [#allocation10], 4
      %s215 = int_to_ptr.vmem [resolvable:$true] %s214
      %217 = dma.vmem_to_hbm [thread:$0]  %s215, 16, %s2, [#allocation7]
    $region29: #{tpu_custom_call.1} parent=1 // pred_fallthru
      _
    // Predicated region
    $region30: #{tpu_custom_call.1} parent=1 // pred_check
      _
    $region31: #{tpu_custom_call.1} parent=1 // pred_check_branch
      %219 = sbr.rel (0) target = $region33
    $region32: #{tpu_custom_call.1} parent=1 // pred_region
      %220 = dma.done [#allocation7], 16
    $region33: #{tpu_custom_call.1} parent=1 // pred_fallthru
      _
    %221 = vsyncpa [#allocation6], 1
    %222 = vsyncpa [#allocation9], 1
    %223 = vsyncpa [#allocation7], 1

</llo_original>
